<compile_context>
chip_gen: v6e
topology: v6e:2x2x1
jax: 0.10.0
libtpu: 0.0.40
codegen_flags: <defaults>
</compile_context>

<pallas_src>
import functools

import jax
import jax.numpy as jnp
from jax import lax
from jax.experimental import pallas as pl
from jax.experimental.pallas import tpu as pltpu


def _vmem_capacity_bytes() -> int:
    try:
        return int(pltpu.get_tpu_info().vmem_capacity_bytes)
    except Exception:
        return 64 * 1024 * 1024  # conservative default (v7x per-TC)


_VMEM_CAP = _vmem_capacity_bytes()


def _round_up(x: int, m: int) -> int:
    return ((x + m - 1) // m) * m


def _gelu(h, approximate: bool):
    if approximate:
        # tanh form -> EUP slot (helps on v5e where the erf VALU polynomial
        # can bind); does not bit-match nn.GELU()'s exact erf form.
        return jax.nn.gelu(h, approximate=True)
    return 0.5 * h * (1.0 + lax.erf(h * jnp.float32(0.7071067811865476)))


# ----------------------------------------------------------------------------
# Path 1: weights fully VMEM-resident, 1-D grid over row tiles.
# ----------------------------------------------------------------------------
def _fused_kernel(x_ref, w1_ref, b1_ref, w2_ref, b2_ref, o_ref, *, approximate):
    # x_ref: (TM, C_in), w1_ref: (C_in, C_out), b1_ref: (1, C_out)
    # w2_ref: (C_out, C_out), b2_ref: (1, C_out), o_ref: (TM, C_out)
    x = x_ref[...]
    h = jnp.dot(x, w1_ref[...], preferred_element_type=jnp.float32)
    h = h + b1_ref[...].astype(jnp.float32)
    h = _gelu(h, approximate)
    y = jnp.dot(h.astype(w2_ref.dtype), w2_ref[...],
                preferred_element_type=jnp.float32)
    y = y + b2_ref[...].astype(jnp.float32)
    o_ref[...] = y.astype(o_ref.dtype)


# ----------------------------------------------------------------------------
# Path 2: w2 does not fit VMEM -> 2-D grid (row tiles x out-feature tiles).
# linear1 + GELU computed once per row tile into VMEM scratch (j == 0) and
# reused for every w2 column panel.
# ----------------------------------------------------------------------------
def _ntiled_kernel(x_ref, w1_ref, b1_ref, w2_ref, b2_ref, o_ref, h_ref, *,
                   approximate):
    @pl.when(pl.program_id(1) == 0)
    def _():
        h = jnp.dot(x_ref[...], w1_ref[...], preferred_element_type=jnp.float32)
        h = h + b1_ref[...].astype(jnp.float32)
        h_ref[...] = _gelu(h, approximate)

    y = jnp.dot(h_ref[...].astype(w2_ref.dtype), w2_ref[...],
                preferred_element_type=jnp.float32)
    y = y + b2_ref[...].astype(jnp.float32)
    o_ref[...] = y.astype(o_ref.dtype)


@functools.partial(jax.jit,
                   static_argnames=("tm", "tn", "gelu_approximate",
                                    "force_path"))
def image_adapter(vision_outputs, w1, b1, w2, b2, *, tm: int = 512,
                  tn: int = 512, gelu_approximate: bool = False,
                  force_path=None):
    """vision_outputs: (..., C_in) -> (..., C_out).

    w1: (C_in, C_out), b1: (C_out,), w2: (C_out, C_out), b2: (C_out,).
    Pass bf16 activations/weights for MXU peak on v6e/v7x (fp32 accumulate).
    """
    *lead, c_in = vision_outputs.shape
    c_out = w1.shape[1]
    m = 1
    for d in lead:
        m *= d
    dtype = vision_outputs.dtype
    x2d = vision_outputs.reshape(m, c_in)
    b1_2d = b1.reshape(1, c_out)
    b2_2d = b2.reshape(1, c_out)

    itx = jnp.dtype(dtype).itemsize
    itw = jnp.dtype(w1.dtype).itemsize
    fp32 = 4

    # Row tile: multiple of sublane packing (8 f32 / 16 bf16 / 32 int8), and
    # for medium M clamp so the grid has >= 2 steps (v7x megacore gets work).
    sublane = 8 * max(1, 4 // itx)
    if m <= sublane:
        tm_eff = m                      # single full-dim tile (legal block)
    else:
        tm_eff = min(_round_up(tm, sublane), _round_up(pl.cdiv(m, 2), sublane))
    grid_m = pl.cdiv(m, tm_eff)

    # VMEM accounting for the fully weight-resident path.
    w_resident = (c_in * c_out + c_out * c_out + 2 * c_out) * itw
    fused_need = (2 * tm_eff * c_in * itx      # x tiles (double-buffered)
                  + 2 * tm_eff * c_out * itx   # out tiles (double-buffered)
                  + w_resident                 # weights, Buffered(1)
                  + 2 * tm_eff * c_out * fp32) # fp32 intermediate h + temps

    if force_path == "fused":
        use_fused = True
    elif force_path == "ntiled":
        use_fused = False
    else:
        use_fused = fused_need <= int(0.65 * _VMEM_CAP)

    cost = pl.CostEstimate(
        flops=2 * m * (c_in * c_out + c_out * c_out),
        transcendentals=m * c_out,
        bytes_accessed=(m * c_in + m * c_out) * itx + w_resident,
    )

    if use_fused:
        vmem_limit = int(min(max(2 * fused_need + (4 << 20), 32 << 20),
                             int(0.9 * _VMEM_CAP)))
        out2d = pl.pallas_call(
            functools.partial(_fused_kernel, approximate=gelu_approximate),
            out_shape=jax.ShapeDtypeStruct((m, c_out), dtype),
            grid=(grid_m,),
            in_specs=[
                # Activation tile streams along the grid (double-buffered).
                pl.BlockSpec((tm_eff, c_in), lambda i: (i, 0)),
                # Weights / biases: fetched once, single VMEM buffer.
                pl.BlockSpec((c_in, c_out), lambda i: (0, 0),
                             pipeline_mode=pl.Buffered(1)),
                pl.BlockSpec((1, c_out), lambda i: (0, 0),
                             pipeline_mode=pl.Buffered(1)),
                pl.BlockSpec((c_out, c_out), lambda i: (0, 0),
                             pipeline_mode=pl.Buffered(1)),
                pl.BlockSpec((1, c_out), lambda i: (0, 0),
                             pipeline_mode=pl.Buffered(1)),
            ],
            out_specs=pl.BlockSpec((tm_eff, c_out), lambda i: (i, 0)),
            compiler_params=pltpu.CompilerParams(
                dimension_semantics=("parallel",),
                vmem_limit_bytes=vmem_limit),
            cost_estimate=cost,
        )(x2d, w1, b1_2d, w2, b2_2d)
    else:
        # N-tiled fallback: only w1 (+ a (c_out, TN) panel of w2) is resident.
        # TODO(synk): if w1 alone exceeds the VMEM budget, a K-tiled variant
        # (accumulate linear1 over C_in panels) is needed as well.
        tn_eff = c_out if tn >= c_out else _round_up(tn, 128)
        grid_n = pl.cdiv(c_out, tn_eff)
        fb_need = (2 * tm_eff * c_in * itx
                   + 2 * tm_eff * tn_eff * itx
                   + (c_in * c_out + c_out) * itw          # w1 + b1 resident
                   + 2 * (c_out * tn_eff + tn_eff) * itw   # streamed w2/b2
                   + tm_eff * c_out * fp32)                # h scratch
        vmem_limit = int(min(max(2 * fb_need + (4 << 20), 32 << 20),
                             int(0.9 * _VMEM_CAP)))
        out2d = pl.pallas_call(
            functools.partial(_ntiled_kernel, approximate=gelu_approximate),
            out_shape=jax.ShapeDtypeStruct((m, c_out), dtype),
            grid=(grid_m, grid_n),
            in_specs=[
                pl.BlockSpec((tm_eff, c_in), lambda i, j: (i, 0)),
                pl.BlockSpec((c_in, c_out), lambda i, j: (0, 0),
                             pipeline_mode=pl.Buffered(1)),
                pl.BlockSpec((1, c_out), lambda i, j: (0, 0),
                             pipeline_mode=pl.Buffered(1)),
                pl.BlockSpec((c_out, tn_eff), lambda i, j: (0, j)),
                pl.BlockSpec((1, tn_eff), lambda i, j: (0, j)),
            ],
            out_specs=pl.BlockSpec((tm_eff, tn_eff), lambda i, j: (i, j)),
            scratch_shapes=[pltpu.VMEM((tm_eff, c_out), jnp.float32)],
            compiler_params=pltpu.CompilerParams(
                dimension_semantics=("parallel", "arbitrary"),
                vmem_limit_bytes=vmem_limit),
            cost_estimate=cost,
        )(x2d, w1, b1_2d, w2, b2_2d)

    return out2d.reshape(*lead, c_out)


def _reference(vision_outputs, w1, b1, w2, b2):
    h = vision_outputs @ w1 + b1
    h = jax.nn.gelu(h, approximate=False)
    return h @ w2 + b2


if __name__ == "__main__":
    # Small shapes consistent with the module: (batch, seq, input_features).
    batch, seq = 2, 8
    input_features, output_features = 32, 64

    key = jax.random.PRNGKey(0)
    kx, kw1, kb1, kw2, kb2 = jax.random.split(key, 5)

    x = jax.random.normal(kx, (batch, seq, input_features), dtype=jnp.float32)
    # Parameters stored as (in, out) for direct x @ W use in the kernel.
    w1 = jax.random.normal(kw1, (input_features, output_features),
                           dtype=jnp.float32) * 0.02
    b1 = jax.random.normal(kb1, (output_features,), dtype=jnp.float32) * 0.01
    w2 = jax.random.normal(kw2, (output_features, output_features),
                           dtype=jnp.float32) * 0.02
    b2 = jax.random.normal(kb2, (output_features,), dtype=jnp.float32) * 0.01

    ref = _reference(x, w1, b1, w2, b2)

    # Default (weight-resident) path.
    out = jax.block_until_ready(image_adapter(x, w1, b1, w2, b2))
    assert out.shape == (batch, seq, output_features)
    assert jnp.allclose(out, ref, atol=1e-4, rtol=1e-4), (
        float(jnp.max(jnp.abs(out - ref))))

    # Also exercise the N-tiled fallback path (used on v7x / large adapters).
    out_nt = jax.block_until_ready(
        image_adapter(x, w1, b1, w2, b2, force_path="ntiled"))
    assert jnp.allclose(out_nt, ref, atol=1e-4, rtol=1e-4), (
        float(jnp.max(jnp.abs(out_nt - ref))))

    print("KERNEL_OK")
</pallas_src>

<mosaic_0001>
module attributes {stable_mosaic.version = 11 : i64} {
  func.func @_fused_kernel(%arg0: i32, %arg1: memref<8x32xf32, #tpu.memory_space<vmem>>, %arg2: memref<32x64xf32, #tpu.memory_space<vmem>>, %arg3: memref<1x64xf32, #tpu.memory_space<vmem>>, %arg4: memref<64x64xf32, #tpu.memory_space<vmem>>, %arg5: memref<1x64xf32, #tpu.memory_space<vmem>>, %arg6: memref<8x64xf32, #tpu.memory_space<vmem>>) attributes {dimension_semantics = [#tpu.dimension_semantics<parallel>], iteration_bounds = array<i64: 2>, scalar_prefetch = 0 : i64, scratch_operands = 0 : i64, tpu.core_type = #tpu.core_type<tc>, window_params = [{transform_indices = @transform_0, window_bounds = array<i64: 8, 32>}, {pipeline_mode = #tpu.pipeline_mode<synchronous>, transform_indices = @transform_1, window_bounds = array<i64: 32, 64>}, {pipeline_mode = #tpu.pipeline_mode<synchronous>, transform_indices = @transform_2, window_bounds = array<i64: 1, 64>}, {pipeline_mode = #tpu.pipeline_mode<synchronous>, transform_indices = @transform_3, window_bounds = array<i64: 64, 64>}, {pipeline_mode = #tpu.pipeline_mode<synchronous>, transform_indices = @transform_4, window_bounds = array<i64: 1, 64>}, {transform_indices = @transform_5, window_bounds = array<i64: 8, 64>}]} {
    %c0 = arith.constant 0 : index
    %c0_0 = arith.constant 0 : index
    %0 = vector.load %arg1[%c0, %c0_0] : memref<8x32xf32, #tpu.memory_space<vmem>>, vector<8x32xf32>
    %c0_1 = arith.constant 0 : index
    %c0_2 = arith.constant 0 : index
    %1 = vector.load %arg2[%c0_1, %c0_2] : memref<32x64xf32, #tpu.memory_space<vmem>>, vector<32x64xf32>
    %cst = arith.constant dense<0.000000e+00> : vector<8x64xf32>
    %2 = tpu.matmul %0, %1, %cst {dimension_numbers = #tpu.dot_dimension_numbers<[1], [0], [0], [1], [0, 0, 1, 1], [], []>} : vector<8x32xf32>, vector<32x64xf32>, vector<8x64xf32> -> vector<8x64xf32>
    %c0_3 = arith.constant 0 : index
    %c0_4 = arith.constant 0 : index
    %3 = vector.load %arg3[%c0_3, %c0_4] : memref<1x64xf32, #tpu.memory_space<vmem>>, vector<1x64xf32>
    %4 = vector.broadcast %3 : vector<1x64xf32> to vector<8x64xf32>
    %5 = arith.addf %2, %4 : vector<8x64xf32>
    %cst_5 = arith.constant 5.000000e-01 : f32
    %6 = vector.broadcast %cst_5 : f32 to vector<8x64xf32>
    %7 = arith.mulf %6, %5 : vector<8x64xf32>
    %cst_6 = arith.constant 0.707106769 : f32
    %8 = vector.broadcast %cst_6 : f32 to vector<8x64xf32>
    %9 = arith.mulf %5, %8 : vector<8x64xf32>
    %10 = math.erf %9 : vector<8x64xf32>
    %cst_7 = arith.constant 1.000000e+00 : f32
    %11 = vector.broadcast %cst_7 : f32 to vector<8x64xf32>
    %12 = arith.addf %11, %10 : vector<8x64xf32>
    %13 = arith.mulf %7, %12 : vector<8x64xf32>
    %c0_8 = arith.constant 0 : index
    %c0_9 = arith.constant 0 : index
    %14 = vector.load %arg4[%c0_8, %c0_9] : memref<64x64xf32, #tpu.memory_space<vmem>>, vector<64x64xf32>
    %cst_10 = arith.constant dense<0.000000e+00> : vector<8x64xf32>
    %15 = tpu.matmul %13, %14, %cst_10 {dimension_numbers = #tpu.dot_dimension_numbers<[1], [0], [0], [1], [0, 0, 1, 1], [], []>} : vector<8x64xf32>, vector<64x64xf32>, vector<8x64xf32> -> vector<8x64xf32>
    %c0_11 = arith.constant 0 : index
    %c0_12 = arith.constant 0 : index
    %16 = vector.load %arg5[%c0_11, %c0_12] : memref<1x64xf32, #tpu.memory_space<vmem>>, vector<1x64xf32>
    %17 = vector.broadcast %16 : vector<1x64xf32> to vector<8x64xf32>
    %18 = arith.addf %15, %17 : vector<8x64xf32>
    %c0_13 = arith.constant 0 : index
    %c0_14 = arith.constant 0 : index
    %19 = vector.load %arg6[%c0_13, %c0_14] : memref<8x64xf32, #tpu.memory_space<vmem>>, vector<8x64xf32>
    tpu.vector_store %arg6[%c0_13, %c0_14], %18 {strides = array<i32>} : memref<8x64xf32, #tpu.memory_space<vmem>>, vector<8x64xf32>,
    return
  }
  func.func @transform_0(%arg0: i32) -> (i32, i32) {
    %c0_i32 = arith.constant 0 : i32
    %c0_i32_0 = arith.constant 0 : i32
    return %arg0, %c0_i32 : i32, i32
  }
  func.func @transform_1(%arg0: i32) -> (i32, i32) {
    %c0_i32 = arith.constant 0 : i32
    %c0_i32_0 = arith.constant 0 : i32
    %c0_i32_1 = arith.constant 0 : i32
    return %c0_i32, %c0_i32_0 : i32, i32
  }
  func.func @transform_2(%arg0: i32) -> (i32, i32) {
    %c0_i32 = arith.constant 0 : i32
    %c0_i32_0 = arith.constant 0 : i32
    %c0_i32_1 = arith.constant 0 : i32
    return %c0_i32, %c0_i32_0 : i32, i32
  }
  func.func @transform_3(%arg0: i32) -> (i32, i32) {
    %c0_i32 = arith.constant 0 : i32
    %c0_i32_0 = arith.constant 0 : i32
    %c0_i32_1 = arith.constant 0 : i32
    return %c0_i32, %c0_i32_0 : i32, i32
  }
  func.func @transform_4(%arg0: i32) -> (i32, i32) {
    %c0_i32 = arith.constant 0 : i32
    %c0_i32_0 = arith.constant 0 : i32
    %c0_i32_1 = arith.constant 0 : i32
    return %c0_i32, %c0_i32_0 : i32, i32
  }
  func.func @transform_5(%arg0: i32) -> (i32, i32) {
    %c0_i32 = arith.constant 0 : i32
    %c0_i32_0 = arith.constant 0 : i32
    return %arg0, %c0_i32 : i32, i32
  }
}

</mosaic_0001>

<llo_original>
// kernel: image_adapter.1
$region0: #{image_adapter.1}
  #allocation0 [shape = 'u32[]', space=smem, size = 0x4, offset = 0x4, fixed_abs, tag = 'smem constant byte address 0x4 - core index']
  #allocation1 [shape = 'u32[144,128]{1,0:T(1,128)}', space=vmem, size = 0x12000, scoped, tag = 'internal scratch']
  %s0 = inlined_call_operand.hbm [shape: f32[16,32], index: 0, kind: input, shape index: {}]
  %s1 = inlined_call_operand.hbm [shape: f32[32,64], index: 1, kind: input, shape index: {}]
  %s2 = inlined_call_operand.vmem [shape: f32[1,64], index: 2, kind: input, shape index: {}]
  %s3 = inlined_call_operand.hbm [shape: f32[64,64], index: 3, kind: input, shape index: {}]
  %s4 = inlined_call_operand.vmem [shape: f32[1,64], index: 4, kind: input, shape index: {}]
  %s5 = inlined_call_operand.hbm [shape: f32[16,64], index: 5, kind: output, shape index: {}]
  %s6 = sld [smem:[#allocation0]]
  $region65: #{image_adapter.1} parent=0
    _
  %s8 = ssub.s32 1, %s6
  %s9 = scalar_select 0, %s8, %s6
  $region1: #{image_adapter.1} parent=0
    #allocation2 [shape = 'u8[8192]{0}', space=vmem, size = 0x2000, scoped, tag = 'input window, operand 0']
    #allocation3 [shape = 's32[2]{0}', space=sflag, size = 0x8, scoped, tag = 'scoped memory for image_adapter.1']
    #allocation4 [shape = 's32[2]{0}', space=sflag, size = 0x8, scoped, tag = 'scoped memory for image_adapter.1']
    #allocation5 [shape = 'u8[16384]{0}', space=vmem, size = 0x4000, scoped, tag = 'input window, operand 1, single buffered']
    #allocation6 [shape = 's32[1]{0}', space=sflag, size = 0x4, scoped, tag = 'scoped memory for image_adapter.1']
    #allocation7 [shape = 'u8[32768]{0}', space=vmem, size = 0x8000, scoped, tag = 'input window, operand 3, single buffered']
    #allocation8 [shape = 'u8[8192]{0}', space=vmem, size = 0x2000, scoped, tag = 'output window, operand 0']
    %10 = vsyncpa [#allocation3], 0
    %s11 = scalar_lea.sflag [#allocation3], 1
    %12 = vsyncpa %s11, 0
    %13 = vsyncpa [#allocation6], 0
    %14 = vsyncpa [#allocation4], 0
    %s15 = scalar_lea.sflag [#allocation4], 1
    %16 = vsyncpa %s15, 0
    loop: start=0, step=1, limit=4
    $region2: #{image_adapter.1} parent=1 // loop_pre_header
      _
    $region3: #{image_adapter.1} parent=1 // loop_header
      %s18 = sphi 0, %s22
      %p19 = scmp.ge.s32.totalorder %s18, 4
      %s28 = sphi 0, %s30
      %s31 = sphi 0, %s28
      %s32 = sphi 0, %s31
      %s48 = sphi 0, %s32
      %s52 = sphi 0, %s52
      %s54 = sphi 0, %s52
      %s55 = sphi 0, %s54
      %s69 = sphi 0, %s55
      %s73 = sphi 0, %s73
      %s75 = sphi 0, %s73
      %s76 = sphi 0, %s75
      %s90 = sphi 0, %s76
      %s94 = sphi 0, %s94
      %s96 = sphi 0, %s94
      %s97 = sphi 0, %s96
      %s111 = sphi 0, %s97
      %s115 = sphi 0, %s115
      %s117 = sphi 0, %s115
      %s118 = sphi 0, %s117
      %s132 = sphi 0, %s118
      %s138 = sphi 0, %s140
      %s141 = sphi 0, %s138
      %s142 = sphi 0, %s141
      %s158 = sphi 0, %s142
    $region4: #{image_adapter.1} parent=1 // loop_header_branch
      %21 = sbr.rel (%p19) target = $region8
    $region5: #{image_adapter.1} parent=1 // loop_body
      %s23 = ssub.s32 %s18, 1
      %s24 = ssub.s32 %s18, 2
      %s25 = sadd.s32 %s18, 1
      %s26 = ssub.s32 %s18, %s25
      %p27 = scmp.eq.s32.totalorder %s26, 0
      %s29 = sadd.s32 %s28, 1
      %s30 = scalar_select %p27, %s28, %s29
      %p33 = pneg %p27
      %p34 = scmp.eq.s32.totalorder %s18, 1
      %p35 = por %p33, %p34
      %p36 = scmp.ne.s32.totalorder %s28, %s31
      %p37 = scmp.eq.s32.totalorder %s18, 0
      %p38 = por %p36, %p37
      %p39 = scmp.ne.s32.totalorder %s28, %s31
      %p40 = scmp.eq.s32.totalorder %s23, 1
      %p41 = por %p39, %p40
      %p42 = scmp.ne.s32.totalorder %s31, %s32
      %p43 = scmp.eq.s32.totalorder %s23, 0
      %p44 = por %p42, %p43
      %p45 = scmp.ne.s32.totalorder %s31, %s32
      %p46 = scmp.eq.s32.totalorder %s24, 1
      %p47 = por %p45, %p46
      %p49 = scmp.ne.s32.totalorder %s32, %s48
      %p50 = scmp.eq.s32.totalorder %s24, 0
      %p51 = por %p49, %p50
      %s53 = sadd.s32 %s52, 1
      %p56 = scmp.eq.s32.totalorder %s18, 1
      %p57 = scmp.ne.s32.totalorder %s52, %s54
      %p58 = scmp.eq.s32.totalorder %s18, 0
      %p59 = por %p57, %p58
      %p60 = scmp.ne.s32.totalorder %s52, %s54
      %p61 = scmp.eq.s32.totalorder %s23, 1
      %p62 = por %p60, %p61
      %p63 = scmp.ne.s32.totalorder %s54, %s55
      %p64 = scmp.eq.s32.totalorder %s23, 0
      %p65 = por %p63, %p64
      %p66 = scmp.ne.s32.totalorder %s54, %s55
      %p67 = scmp.eq.s32.totalorder %s24, 1
      %p68 = por %p66, %p67
      %p70 = scmp.ne.s32.totalorder %s55, %s69
      %p71 = scmp.eq.s32.totalorder %s24, 0
      %p72 = por %p70, %p71
      %s74 = sadd.s32 %s73, 1
      %p77 = scmp.eq.s32.totalorder %s18, 1
      %p78 = scmp.ne.s32.totalorder %s73, %s75
      %p79 = scmp.eq.s32.totalorder %s18, 0
      %p80 = por %p78, %p79
      %p81 = scmp.ne.s32.totalorder %s73, %s75
      %p82 = scmp.eq.s32.totalorder %s23, 1
      %p83 = por %p81, %p82
      %p84 = scmp.ne.s32.totalorder %s75, %s76
      %p85 = scmp.eq.s32.totalorder %s23, 0
      %p86 = por %p84, %p85
      %p87 = scmp.ne.s32.totalorder %s75, %s76
      %p88 = scmp.eq.s32.totalorder %s24, 1
      %p89 = por %p87, %p88
      %p91 = scmp.ne.s32.totalorder %s76, %s90
      %p92 = scmp.eq.s32.totalorder %s24, 0
      %p93 = por %p91, %p92
      %s95 = sadd.s32 %s94, 1
      %p98 = scmp.eq.s32.totalorder %s18, 1
      %p99 = scmp.ne.s32.totalorder %s94, %s96
      %p100 = scmp.eq.s32.totalorder %s18, 0
      %p101 = por %p99, %p100
      %p102 = scmp.ne.s32.totalorder %s94, %s96
      %p103 = scmp.eq.s32.totalorder %s23, 1
      %p104 = por %p102, %p103
      %p105 = scmp.ne.s32.totalorder %s96, %s97
      %p106 = scmp.eq.s32.totalorder %s23, 0
      %p107 = por %p105, %p106
      %p108 = scmp.ne.s32.totalorder %s96, %s97
      %p109 = scmp.eq.s32.totalorder %s24, 1
      %p110 = por %p108, %p109
      %p112 = scmp.ne.s32.totalorder %s97, %s111
      %p113 = scmp.eq.s32.totalorder %s24, 0
      %p114 = por %p112, %p113
      %s116 = sadd.s32 %s115, 1
      %p119 = scmp.eq.s32.totalorder %s18, 1
      %p120 = scmp.ne.s32.totalorder %s115, %s117
      %p121 = scmp.eq.s32.totalorder %s18, 0
      %p122 = por %p120, %p121
      %p123 = scmp.ne.s32.totalorder %s115, %s117
      %p124 = scmp.eq.s32.totalorder %s23, 1
      %p125 = por %p123, %p124
      %p126 = scmp.ne.s32.totalorder %s117, %s118
      %p127 = scmp.eq.s32.totalorder %s23, 0
      %p128 = por %p126, %p127
      %p129 = scmp.ne.s32.totalorder %s117, %s118
      %p130 = scmp.eq.s32.totalorder %s24, 1
      %p131 = por %p129, %p130
      %p133 = scmp.ne.s32.totalorder %s118, %s132
      %p134 = scmp.eq.s32.totalorder %s24, 0
      %p135 = por %p133, %p134
      %s136 = ssub.s32 %s18, %s25
      %p137 = scmp.eq.s32.totalorder %s136, 0
      %s139 = sadd.s32 %s138, 1
      %s140 = scalar_select %p137, %s138, %s139
      %p143 = pneg %p137
      %p144 = scmp.eq.s32.totalorder %s18, 1
      %p145 = por %p143, %p144
      %p146 = scmp.ne.s32.totalorder %s138, %s141
      %p147 = scmp.eq.s32.totalorder %s18, 0
      %p148 = por %p146, %p147
      %p149 = scmp.ne.s32.totalorder %s138, %s141
      %p150 = scmp.eq.s32.totalorder %s23, 1
      %p151 = por %p149, %p150
      %p152 = scmp.ne.s32.totalorder %s141, %s142
      %p153 = scmp.eq.s32.totalorder %s23, 0
      %p154 = por %p152, %p153
      %p155 = scmp.ne.s32.totalorder %s141, %s142
      %p156 = scmp.eq.s32.totalorder %s24, 1
      %p157 = por %p155, %p156
      %p159 = scmp.ne.s32.totalorder %s142, %s158
      %p160 = scmp.eq.s32.totalorder %s24, 0
      %p161 = por %p159, %p160
      %p162 = scmp.le.s32.totalorder 1, %s18
      %p163 = scmp.lt.s32.totalorder %s18, 3
      %p164 = pnand %p162, %p163
      %p165 = pneg %p164
      // Predicated region
      $region9: #{image_adapter.1} parent=5 // pred_check
        _
      $region10: #{image_adapter.1} parent=5 // pred_check_branch
        %167 = sbr.rel (%p164) target = $region12
      $region11: #{image_adapter.1} parent=5 // pred_region
        %s168 = ssub.s32 %s18, 1
        // Predicated region
        $region13: #{image_adapter.1} parent=11 // pred_check
          %p169 = pneg %p65
        $region14: #{image_adapter.1} parent=11 // pred_check_branch
          %171 = sbr.rel (%p169) target = $region16
        $region15: #{image_adapter.1} parent=11 // pred_region
          %s173 = ssub.s32 512, 512
          %174 = vsyncadd [#allocation6], %s173
          %s175 = sshll.u32 [#allocation5], 4
          %s176 = int_to_ptr.vmem [resolvable:$true] %s175
          %181 = dma.hbm_to_vmem [thread:$0]  %s1, 512, %s176, [#allocation6], 128, 128, 8
        $region16: #{image_adapter.1} parent=11 // pred_fallthru
          _
        // Predicated region
        $region17: #{image_adapter.1} parent=11 // pred_check
          %p182 = pneg %p86
        $region18: #{image_adapter.1} parent=11 // pred_check_branch
          %184 = sbr.rel (%p182) target = $region20
        $region19: #{image_adapter.1} parent=11 // pred_region
          _
        $region20: #{image_adapter.1} parent=11 // pred_fallthru
          _
        // Predicated region
        $region21: #{image_adapter.1} parent=11 // pred_check
          %p185 = pneg %p107
        $region22: #{image_adapter.1} parent=11 // pred_check_branch
          %187 = sbr.rel (%p185) target = $region24
        $region23: #{image_adapter.1} parent=11 // pred_region
          %s189 = ssub.s32 1024, 1024
          %190 = vsyncadd [#allocation6], %s189
          %s191 = sshll.u32 [#allocation7], 4
          %s192 = int_to_ptr.vmem [resolvable:$true] %s191
          %197 = dma.hbm_to_vmem [thread:$0]  %s3, 1024, %s192, [#allocation6], 128, 128, 8
        $region24: #{image_adapter.1} parent=11 // pred_fallthru
          _
        // Predicated region
        $region25: #{image_adapter.1} parent=11 // pred_check
          %p198 = pneg %p128
        $region26: #{image_adapter.1} parent=11 // pred_check_branch
          %200 = sbr.rel (%p198) target = $region28
        $region27: #{image_adapter.1} parent=11 // pred_region
          _
        $region28: #{image_adapter.1} parent=11 // pred_fallthru
          _
      $region12: #{image_adapter.1} parent=5 // pred_fallthru
        _
      %p201 = scmp.lt.s32.totalorder %s18, 2
      // Predicated region
      $region29: #{image_adapter.1} parent=5 // pred_check
        %p202 = pneg %p201
      $region30: #{image_adapter.1} parent=5 // pred_check_branch
        %204 = sbr.rel (%p202) target = $region32
      $region31: #{image_adapter.1} parent=5 // pred_region
        // Predicated region
        $region33: #{image_adapter.1} parent=31 // pred_check
          %p205 = pneg %p38
        $region34: #{image_adapter.1} parent=31 // pred_check_branch
          %207 = sbr.rel (%p205) target = $region36
        $region35: #{image_adapter.1} parent=31 // pred_region
          %s208 = sand.u32 %s28, 1
          %s209 = scalar_lea.sflag [#allocation3], %s208
          %s210 = sand.u32 %s28, 1
          %s211 = smul.addr %s210, 8
          %s212 = scalar_lea.vmem [#allocation2], %s211
          %s214 = ssub.s32 128, 128
          %215 = vsyncadd %s209, %s214
          %s216 = smul.addr %s18, 128
          %s217 = scalar_lea.hbm %s0, %s216
          %s219 = sshll.u32 %s212, 4
          %s220 = int_to_ptr.vmem [resolvable:$true] %s219
          %222 = dma.hbm_to_vmem [thread:$0]  %s217, 128, %s220, %s209
        $region36: #{image_adapter.1} parent=31 // pred_fallthru
          _
      $region32: #{image_adapter.1} parent=5 // pred_fallthru
        _
      %p223 = scmp.le.s32.totalorder 1, %s18
      %p224 = scmp.lt.s32.totalorder %s18, 3
      %p225 = pnand %p223, %p224
      %p226 = pneg %p225
      // Predicated region
      $region37: #{image_adapter.1} parent=5 // pred_check
        _
      $region38: #{image_adapter.1} parent=5 // pred_check_branch
        %228 = sbr.rel (%p225) target = $region40
      $region39: #{image_adapter.1} parent=5 // pred_region
        %s229 = ssub.s32 %s18, 1
        %s230 = sand.u32 %s31, 1
        %s231 = scalar_lea.sflag [#allocation3], %s230
        %s232 = sand.u32 %s31, 1
        %s233 = smul.addr %s232, 8
        %s234 = scalar_lea.vmem [#allocation2], %s233
        // Predicated region
        $region41: #{image_adapter.1} parent=39 // pred_check
          %p235 = pneg %p44
        $region42: #{image_adapter.1} parent=39 // pred_check_branch
          %237 = sbr.rel (%p235) target = $region44
        $region43: #{image_adapter.1} parent=39 // pred_region
          %238 = dma.done %s231, 128
        $region44: #{image_adapter.1} parent=39 // pred_fallthru
          _
        // Predicated region
        $region45: #{image_adapter.1} parent=39 // pred_check
          %p239 = pneg %p65
        $region46: #{image_adapter.1} parent=39 // pred_check_branch
          %241 = sbr.rel (%p239) target = $region48
        $region47: #{image_adapter.1} parent=39 // pred_region
          %242 = dma.done [#allocation6], 512
        $region48: #{image_adapter.1} parent=39 // pred_fallthru
          _
        // Predicated region
        $region49: #{image_adapter.1} parent=39 // pred_check
          %p243 = pneg %p107
        $region50: #{image_adapter.1} parent=39 // pred_check_branch
          %245 = sbr.rel (%p243) target = $region52
        $region51: #{image_adapter.1} parent=39 // pred_region
          %246 = dma.done [#allocation6], 1024
        $region52: #{image_adapter.1} parent=39 // pred_fallthru
          _
        %s247 = sand.u32 %s31, 1
        %s248 = scalar_lea.sflag [#allocation3], %s247
        %s249 = sand.u32 %s31, 1
        %s250 = smul.addr %s249, 8
        %s251 = scalar_lea.vmem [#allocation2], %s250
        %p252 = pneg %p44
        %p253 = pneg %p41
        %p254 = pneg %p65
        %p255 = pneg %p62
        %p256 = pneg %p86
        %p257 = pneg %p83
        %p258 = pneg %p107
        %p259 = pneg %p104
        %p260 = pneg %p128
        %p261 = pneg %p125
        %p262 = pneg %p154
        %p263 = pneg %p151
        %s264 = sand.u32 %s141, 1
        %s265 = scalar_lea.sflag [#allocation4], %s264
        %s266 = sand.u32 %s141, 1
        %s267 = smul.addr %s266, 8
        %s268 = scalar_lea.vmem [#allocation8], %s267
        %v269 = vld [vmem:[%s234] sm:$0xff]
        %v270 = vld [vmem:[#allocation5] sm:$0xff]
        %v271 = vld [vmem:[#allocation5 + $0x8] sm:$0xff]
        %v272 = vld [vmem:[#allocation5 + $0x10] sm:$0xff]
        %v273 = vld [vmem:[#allocation5 + $0x18] sm:$0xff]
        %v274 = vld [vmem:[%s2] sm:$0x1]
        %v276 = vlaneseq
        %v277 = vshrl.u32 %v276, 7
        %v278 = vsub.s32 0, %v277
        %v279 = vrot.slane %v274, %v278
        %vm281 = vcmask 261120
        %v283 = vsel %vm281, %v269, 0
        %285 = vmatprep.subr.mxu0 0.0
        %286 = vmatpush1.msra.mxu0 0.0
        %287 = vmatprep.subr.mxu0 0.0
        %288 = vmatpush1.msra.mxu0 0.0
        %289 = vmatprep.subr.mxu0 0.0
        %290 = vmatpush1.msra.mxu0 0.0
        %291 = vmatprep.subr.mxu0 0.0
        %292 = vmatpush1.msra.mxu0 0.0
        %293 = vmatprep.subr.mxu0 0.0
        %294 = vmatpush1.msra.mxu0 0.0
        %295 = vmatprep.subr.mxu0 0.0
        %296 = vmatpush1.msra.mxu0 0.0
        %297 = vmatprep.subr.mxu0 0.0
        %298 = vmatpush1.msra.mxu0 0.0
        %299 = vmatprep.subr.mxu0 0.0
        %300 = vmatpush1.msra.mxu0 0.0
        %301 = vmatprep.subr.mxu0 0.0
        %302 = vmatpush1.msra.mxu0 0.0
        %303 = vmatprep.subr.mxu0 0.0
        %304 = vmatpush1.msra.mxu0 0.0
        %305 = vmatprep.subr.mxu0 0.0
        %306 = vmatpush1.msra.mxu0 0.0
        %307 = vmatprep.subr.mxu0 0.0
        %308 = vmatpush1.msra.mxu0 0.0
        %309 = vmatprep.subr.mxu0 0.0
        %310 = vmatpush1.msra.mxu0 %v273
        %311 = vmatprep.subr.mxu0 0.0
        %312 = vmatpush1.msra.mxu0 %v272
        %313 = vmatprep.subr.mxu0 0.0
        %314 = vmatpush1.msra.mxu0 %v271
        %315 = vmatprep.subr.mxu0 0.0
        %316 = vmatpush1.msra.mxu0 %v270
        %317 = vmatprep.subr.mxu0 0.0
        %318 = vmatpush2.msra.mxu0 0.0
        %319 = vmatprep.subr.mxu0 0.0
        %320 = vmatpush2.msra.mxu0 0.0
        %321 = vmatprep.subr.mxu0 0.0
        %322 = vmatpush2.msra.mxu0 0.0
        %323 = vmatprep.subr.mxu0 0.0
        %324 = vmatpush2.msra.mxu0 0.0
        %325 = vmatprep.subr.mxu0 0.0
        %326 = vmatpush2.msra.mxu0 0.0
        %327 = vmatprep.subr.mxu0 0.0
        %328 = vmatpush2.msra.mxu0 0.0
        %329 = vmatprep.subr.mxu0 0.0
        %330 = vmatpush2.msra.mxu0 0.0
        %331 = vmatprep.subr.mxu0 0.0
        %332 = vmatpush2.msra.mxu0 0.0
        %333 = vmatprep.subr.mxu0 0.0
        %334 = vmatpush2.msra.mxu0 0.0
        %335 = vmatprep.subr.mxu0 0.0
        %336 = vmatpush2.msra.mxu0 0.0
        %337 = vmatprep.subr.mxu0 0.0
        %338 = vmatpush2.msra.mxu0 0.0
        %339 = vmatprep.subr.mxu0 0.0
        %340 = vmatpush2.msra.mxu0 0.0
        %341 = vmatprep.subr.mxu0 0.0
        %342 = vmatpush2.msra.mxu0 0.0
        %343 = vmatprep.subr.mxu0 0.0
        %344 = vmatpush2.msra.mxu0 0.0
        %345 = vmatprep.subr.mxu0 0.0
        %346 = vmatpush2.msra.mxu0 0.0
        %347 = vmatprep.subr.mxu0 0.0
        %348 = vmatpush2.msra.mxu0 0.0
        %349 = vmatprep.mubr.f32.mxu0 0.0
        %350 = vmatmul.mubr.f32.gmra.mxu0 %v283
        %v351 = vpop.f32.mrf.mxu0
        %v352 = vadd.f32 %v279, %v351
        %v353 = vpop.f32.mrf.mxu0
        %354 = vdwg.mxu0
        %v355 = vmul.f32 %v352, 0.5
        %v356 = vmul.f32 %v352, 0.70710677
        %v357 = verf.f32.pop %v356
        %v358 = vadd.f32 %v357, 1.0
        %v359 = vmul.f32 %v355, %v358
        %v360 = vld [vmem:[#allocation7] sm:$0xff]
        %v361 = vld [vmem:[#allocation7 + $0x8] sm:$0xff]
        %v362 = vld [vmem:[#allocation7 + $0x10] sm:$0xff]
        %v363 = vld [vmem:[#allocation7 + $0x18] sm:$0xff]
        %v364 = vld [vmem:[#allocation7 + $0x20] sm:$0xff]
        %v365 = vld [vmem:[#allocation7 + $0x28] sm:$0xff]
        %v366 = vld [vmem:[#allocation7 + $0x30] sm:$0xff]
        %v367 = vld [vmem:[#allocation7 + $0x38] sm:$0xff]
        %v368 = vld [vmem:[%s4] sm:$0x1]
        %v370 = vlaneseq
        %v371 = vshrl.u32 %v370, 7
        %v372 = vsub.s32 0, %v371
        %v373 = vrot.slane %v368, %v372
        %vm375 = vcmask 523264
        %v377 = vsel %vm375, %v359, 0
        %379 = vmatprep.subr.mxu0 0.0
        %380 = vmatpush1.msra.mxu0 0.0
        %381 = vmatprep.subr.mxu0 0.0
        %382 = vmatpush1.msra.mxu0 0.0
        %383 = vmatprep.subr.mxu0 0.0
        %384 = vmatpush1.msra.mxu0 0.0
        %385 = vmatprep.subr.mxu0 0.0
        %386 = vmatpush1.msra.mxu0 0.0
        %387 = vmatprep.subr.mxu0 0.0
        %388 = vmatpush1.msra.mxu0 0.0
        %389 = vmatprep.subr.mxu0 0.0
        %390 = vmatpush1.msra.mxu0 0.0
        %391 = vmatprep.subr.mxu0 0.0
        %392 = vmatpush1.msra.mxu0 0.0
        %393 = vmatprep.subr.mxu0 0.0
        %394 = vmatpush1.msra.mxu0 0.0
        %395 = vmatprep.subr.mxu0 0.0
        %396 = vmatpush1.msra.mxu0 %v367
        %397 = vmatprep.subr.mxu0 0.0
        %398 = vmatpush1.msra.mxu0 %v366
        %399 = vmatprep.subr.mxu0 0.0
        %400 = vmatpush1.msra.mxu0 %v365
        %401 = vmatprep.subr.mxu0 0.0
        %402 = vmatpush1.msra.mxu0 %v364
        %403 = vmatprep.subr.mxu0 0.0
        %404 = vmatpush1.msra.mxu0 %v363
        %405 = vmatprep.subr.mxu0 0.0
        %406 = vmatpush1.msra.mxu0 %v362
        %407 = vmatprep.subr.mxu0 0.0
        %408 = vmatpush1.msra.mxu0 %v361
        %409 = vmatprep.subr.mxu0 0.0
        %410 = vmatpush1.msra.mxu0 %v360
        %411 = vmatprep.subr.mxu0 0.0
        %412 = vmatpush2.msra.mxu0 0.0
        %413 = vmatprep.subr.mxu0 0.0
        %414 = vmatpush2.msra.mxu0 0.0
        %415 = vmatprep.subr.mxu0 0.0
        %416 = vmatpush2.msra.mxu0 0.0
        %417 = vmatprep.subr.mxu0 0.0
        %418 = vmatpush2.msra.mxu0 0.0
        %419 = vmatprep.subr.mxu0 0.0
        %420 = vmatpush2.msra.mxu0 0.0
        %421 = vmatprep.subr.mxu0 0.0
        %422 = vmatpush2.msra.mxu0 0.0
        %423 = vmatprep.subr.mxu0 0.0
        %424 = vmatpush2.msra.mxu0 0.0
        %425 = vmatprep.subr.mxu0 0.0
        %426 = vmatpush2.msra.mxu0 0.0
        %427 = vmatprep.subr.mxu0 0.0
        %428 = vmatpush2.msra.mxu0 0.0
        %429 = vmatprep.subr.mxu0 0.0
        %430 = vmatpush2.msra.mxu0 0.0
        %431 = vmatprep.subr.mxu0 0.0
        %432 = vmatpush2.msra.mxu0 0.0
        %433 = vmatprep.subr.mxu0 0.0
        %434 = vmatpush2.msra.mxu0 0.0
        %435 = vmatprep.subr.mxu0 0.0
        %436 = vmatpush2.msra.mxu0 0.0
        %437 = vmatprep.subr.mxu0 0.0
        %438 = vmatpush2.msra.mxu0 0.0
        %439 = vmatprep.subr.mxu0 0.0
        %440 = vmatpush2.msra.mxu0 0.0
        %441 = vmatprep.subr.mxu0 0.0
        %442 = vmatpush2.msra.mxu0 0.0
        %443 = vmatprep.mubr.f32.mxu0 0.0
        %444 = vmatmul.mubr.f32.gmra.mxu0 %v377
        %v445 = vpop.f32.mrf.mxu0
        %v446 = vadd.f32 %v373, %v445
        %v447 = vpop.f32.mrf.mxu0
        %448 = vdwg.mxu0
        %449 = vst.msk [vmem:[%s268] sm:$0xff] %vm375, %v446
        %s450 = sand.u32 %s141, 1
        %s451 = scalar_lea.sflag [#allocation4], %s450
        %s452 = sand.u32 %s141, 1
        %s453 = smul.addr %s452, 8
        %s454 = scalar_lea.vmem [#allocation8], %s453
        // Predicated region
        $region53: #{image_adapter.1} parent=39 // pred_check
          %p455 = pneg %p151
        $region54: #{image_adapter.1} parent=39 // pred_check_branch
          %457 = sbr.rel (%p455) target = $region56
        $region55: #{image_adapter.1} parent=39 // pred_region
          %s459 = ssub.s32 128, 128
          %460 = vsyncadd %s451, %s459
          %s461 = smul.addr %s23, 128
          %s462 = scalar_lea.hbm %s5, %s461
          %s464 = sshll.u32 %s454, 4
          %s465 = int_to_ptr.vmem [resolvable:$true] %s464
          %467 = dma.vmem_to_hbm [thread:$0]  %s465, 128, %s462, %s451
        $region56: #{image_adapter.1} parent=39 // pred_fallthru
          _
      $region40: #{image_adapter.1} parent=5 // pred_fallthru
        _
      %p468 = scmp.le.s32.totalorder 2, %s18
      // Predicated region
      $region57: #{image_adapter.1} parent=5 // pred_check
        %p469 = pneg %p468
      $region58: #{image_adapter.1} parent=5 // pred_check_branch
        %471 = sbr.rel (%p469) target = $region60
      $region59: #{image_adapter.1} parent=5 // pred_region
        %s472 = ssub.s32 %s18, 2
        // Predicated region
        $region61: #{image_adapter.1} parent=59 // pred_check
          %p473 = pneg %p157
        $region62: #{image_adapter.1} parent=59 // pred_check_branch
          %475 = sbr.rel (%p473) target = $region64
        $region63: #{image_adapter.1} parent=59 // pred_region
          %s476 = sand.u32 %s142, 1
          %s477 = scalar_lea.sflag [#allocation4], %s476
          %s478 = sand.u32 %s142, 1
          %s479 = smul.addr %s478, 8
          %s480 = scalar_lea.vmem [#allocation8], %s479
          %481 = dma.done %s477, 128
        $region64: #{image_adapter.1} parent=59 // pred_fallthru
          _
      $region60: #{image_adapter.1} parent=5 // pred_fallthru
        _
    $region6: #{image_adapter.1} parent=1 // loop_footer
      %s22 = sadd.s32 1, %s18
    $region7: #{image_adapter.1} parent=1 // loop_footer_branch
      %17 = sbr.rel target = $region3
    $region8: #{image_adapter.1} parent=1 // loop_exit
      _
    %482 = vsyncpa [#allocation3], 1
    %s483 = scalar_lea.sflag [#allocation3], 1
    %484 = vsyncpa %s483, 1
    %485 = vsyncpa [#allocation6], 1
    %486 = vsyncpa [#allocation4], 1
    %s487 = scalar_lea.sflag [#allocation4], 1
    %488 = vsyncpa %s487, 1

</llo_original>
